<compile_context>
chip_gen: v7x
topology: tpu7x:2x2x1
jax: 0.10.0
libtpu: 0.0.40
codegen_flags: <defaults>
</compile_context>

<pallas_src>
import functools

import jax
import jax.numpy as jnp
import numpy as np
from jax.experimental import pallas as pl
from jax.experimental.pallas import tpu as pltpu

LANE = 128
SUB = 8
SMOOTH = 1e-5


def _dice_partial_kernel(score_ref, tgt_ref, out_ref, *, n_classes, tn, hw_rows, ragged):
    """Per-(batch, pixel-chunk) partial sums.

    score_ref: (1, C, tn, LANE) f32
    tgt_ref:   (1, tn, LANE)    i32
    out_ref:   (1, 1, 3*C*SUB, LANE) f32   layout: [intersect | y_sum | z_sum] x C x SUB
    """
    C = n_classes
    r = tn // SUB

    t = tgt_ref[0]  # (tn, LANE) int32 labels (padded entries are -1)

    if ragged:
        # Last chunk may read past the (already sublane-padded) array: mask garbage rows.
        row0 = pl.program_id(1) * tn
        rows_idx = jax.lax.broadcasted_iota(jnp.int32, (tn, LANE), 0) + row0
        mask = (rows_idx < hw_rows).astype(jnp.float32)
    else:
        mask = None

    def red(x):  # (tn, LANE) -> (SUB, LANE): vreg-aligned adds only (no lane reduction)
        return jnp.sum(x.reshape(r, SUB, LANE), axis=0)

    csub = C * SUB
    for i in range(C):  # C is small & static; unrolled at trace time
        si = score_ref[0, i]                       # (tn, LANE) f32
        ti = (t == i).astype(jnp.float32)          # one-hot for class i
        if mask is not None:
            si = si * mask
            ti = ti * mask
        inter_i = red(si * ti)
        y_i = red(ti)                              # one-hot => t*t == t
        z_i = red(si * si)
        out_ref[0, 0, i * SUB:(i + 1) * SUB, :] = inter_i
        out_ref[0, 0, csub + i * SUB:csub + (i + 1) * SUB, :] = y_i
        out_ref[0, 0, 2 * csub + i * SUB:2 * csub + (i + 1) * SUB, :] = z_i


@functools.partial(jax.jit, static_argnames=("n_classes", "softmax"))
def dice_loss(inputs, target, *, n_classes, weight=None, softmax=False):
    """Matches DiceLoss.forward(inputs, target, weight, softmax).

    inputs: [B, C, H, W] float, target: [B, 1, H, W] (or [B, H, W]) integer labels.
    Returns a scalar float32 loss.
    """
    B, C, H, W = inputs.shape
    assert C == n_classes, "predict & target shape do not match"

    x = inputs.astype(jnp.float32)
    if softmax:
        x = jax.nn.softmax(x, axis=1)
    if target.ndim == 4:
        target = target[:, 0]

    HW = H * W
    rows = -(-HW // LANE)                 # cdiv(HW, LANE)
    rows8 = -(-rows // SUB) * SUB         # sublane-align row count
    hw_pad = rows8 * LANE

    score = x.reshape(B, C, HW)
    tgt = target.astype(jnp.int32).reshape(B, HW)
    if hw_pad != HW:
        # Tiny alignment pad (no transpose; only hit when H*W is not (8*128)-aligned).
        score = jnp.pad(score, ((0, 0), (0, 0), (0, hw_pad - HW)))
        tgt = jnp.pad(tgt, ((0, 0), (0, hw_pad - HW)), constant_values=-1)
    score = score.reshape(B, C, rows8, LANE)
    tgt = tgt.reshape(B, rows8, LANE)

    # Pixel tile: as many rows as fit a ~3 MiB score block, capped at 1024 rows.
    budget_rows = (3 * 1024 * 1024) // (C * LANE * 4)
    tn = max(SUB, min(1024, (budget_rows // SUB) * SUB))
    tn = min(tn, rows8)
    kn = -(-rows8 // tn)
    ragged = (rows8 % tn) != 0

    kernel = functools.partial(
        _dice_partial_kernel, n_classes=C, tn=tn, hw_rows=rows8, ragged=ragged)

    parts = pl.pallas_call(
        kernel,
        out_shape=jax.ShapeDtypeStruct((B, kn, 3 * C * SUB, LANE), jnp.float32),
        grid_spec=pltpu.PrefetchScalarGridSpec(
            num_scalar_prefetch=0,
            grid=(B, kn),
            in_specs=[
                pl.BlockSpec((1, C, tn, LANE), lambda b, j: (b, 0, j, 0)),  # score
                pl.BlockSpec((1, tn, LANE), lambda b, j: (b, j, 0)),        # labels
            ],
            out_specs=pl.BlockSpec((1, 1, 3 * C * SUB, LANE),
                                   lambda b, j: (b, j, 0, 0)),
        ),
        compiler_params=pltpu.CompilerParams(
            dimension_semantics=("parallel", "parallel")),
    )(score, tgt)

    # Final (tiny) reduction + dice formula + weighting in the wrapper.
    sums = parts.reshape(B, kn, 3, C, SUB, LANE).sum(axis=(0, 1, 4, 5))  # (3, C)
    intersect, y_sum, z_sum = sums[0], sums[1], sums[2]

    if weight is None:
        w = jnp.ones((n_classes,), jnp.float32)
    else:
        w = jnp.asarray(weight, dtype=jnp.float32)

    dice = 1.0 - (2.0 * intersect + SMOOTH) / (z_sum + y_sum + SMOOTH)
    return jnp.sum(dice * w) / n_classes
    # TODO(synk): PyTorch also builds class_wise_dice via .item(); that host-side
    # list has no effect on the returned loss and is omitted here.


def _reference(inputs, target, n_classes, weight=None, softmax=False):
    """Pure-JAX reference mirroring the PyTorch module exactly."""
    if softmax:
        inputs = jax.nn.softmax(inputs.astype(jnp.float32), axis=1)
    if target.ndim == 4:
        target = target[:, 0]
    if weight is None:
        weight = [1.0] * n_classes
    loss = 0.0
    for i in range(n_classes):
        score = inputs[:, i].astype(jnp.float32)
        t = (target == i).astype(jnp.float32)
        intersect = jnp.sum(score * t)
        y_sum = jnp.sum(t * t)
        z_sum = jnp.sum(score * score)
        dice = 1.0 - (2.0 * intersect + SMOOTH) / (z_sum + y_sum + SMOOTH)
        loss = loss + dice * weight[i]
    return loss / n_classes


if __name__ == "__main__":
    key = jax.random.PRNGKey(0)
    k1, k2 = jax.random.split(key)

    B, C, H, W = 2, 4, 16, 16
    logits = jax.random.normal(k1, (B, C, H, W), dtype=jnp.float32)
    labels = jax.random.randint(k2, (B, 1, H, W), 0, C, dtype=jnp.int32)

    loss = dice_loss(logits, labels, n_classes=C, softmax=True)
    loss = jax.block_until_ready(loss)

    ref = _reference(logits, labels, C, softmax=True)
    np.testing.assert_allclose(np.asarray(loss), np.asarray(ref), rtol=1e-5, atol=1e-6)

    print("KERNEL_OK")
</pallas_src>

<mosaic_0001>
module attributes {stable_mosaic.version = 11 : i64} {
  func.func @_dice_partial_kernel(%arg0: i32, %arg1: i32, %arg2: memref<1x4x8x128xf32, #tpu.memory_space<vmem>>, %arg3: memref<1x8x128xi32, #tpu.memory_space<vmem>>, %arg4: memref<1x1x96x128xf32, #tpu.memory_space<vmem>>) attributes {dimension_semantics = [#tpu.dimension_semantics<parallel>, #tpu.dimension_semantics<parallel>], iteration_bounds = array<i64: 2, 1>, scalar_prefetch = 0 : i64, scratch_operands = 0 : i64, tpu.core_type = #tpu.core_type<tc>, window_params = [{transform_indices = @transform_0, window_bounds = array<i64: 1, 4, 8, 128>}, {transform_indices = @transform_1, window_bounds = array<i64: 1, 8, 128>}, {transform_indices = @transform_2, window_bounds = array<i64: 1, 1, 96, 128>}]} {
    %c0 = arith.constant 0 : index
    %c0_0 = arith.constant 0 : index
    %c0_1 = arith.constant 0 : index
    %0 = vector.load %arg3[%c0, %c0_0, %c0_1] : memref<1x8x128xi32, #tpu.memory_space<vmem>>, vector<1x8x128xi32>
    %1 = vector.shape_cast %0 : vector<1x8x128xi32> to vector<8x128xi32>
    %c0_2 = arith.constant 0 : index
    %c0_3 = arith.constant 0 : index
    %c0_4 = arith.constant 0 : index
    %c0_5 = arith.constant 0 : index
    %2 = vector.load %arg2[%c0_2, %c0_3, %c0_4, %c0_5] : memref<1x4x8x128xf32, #tpu.memory_space<vmem>>, vector<1x1x8x128xf32>
    %3 = vector.shape_cast %2 : vector<1x1x8x128xf32> to vector<8x128xf32>
    %c0_i32 = arith.constant 0 : i32
    %4 = vector.broadcast %c0_i32 : i32 to vector<8x128xi32>
    %5 = arith.cmpi eq, %1, %4 : vector<8x128xi32>
    %6 = arith.extui %5 : vector<8x128xi1> to vector<8x128xi32>
    %7 = arith.sitofp %6 : vector<8x128xi32> to vector<8x128xf32>
    %8 = arith.mulf %3, %7 : vector<8x128xf32>
    %9 = vector.shape_cast %8 : vector<8x128xf32> to vector<1x8x128xf32>
    %cst = arith.constant dense<0.000000e+00> : vector<8x128xf32>
    %10 = vector.multi_reduction <add>, %9, %cst [0] : vector<1x8x128xf32> to vector<8x128xf32>
    %11 = vector.shape_cast %7 : vector<8x128xf32> to vector<1x8x128xf32>
    %cst_6 = arith.constant dense<0.000000e+00> : vector<8x128xf32>
    %12 = vector.multi_reduction <add>, %11, %cst_6 [0] : vector<1x8x128xf32> to vector<8x128xf32>
    %13 = arith.mulf %3, %3 : vector<8x128xf32>
    %14 = vector.shape_cast %13 : vector<8x128xf32> to vector<1x8x128xf32>
    %cst_7 = arith.constant dense<0.000000e+00> : vector<8x128xf32>
    %15 = vector.multi_reduction <add>, %14, %cst_7 [0] : vector<1x8x128xf32> to vector<8x128xf32>
    %c0_8 = arith.constant 0 : index
    %c0_9 = arith.constant 0 : index
    %c0_10 = arith.constant 0 : index
    %c0_11 = arith.constant 0 : index
    %16 = vector.load %arg4[%c0_8, %c0_9, %c0_10, %c0_11] : memref<1x1x96x128xf32, #tpu.memory_space<vmem>>, vector<1x1x8x128xf32>
    %17 = vector.shape_cast %16 : vector<1x1x8x128xf32> to vector<8x128xf32>
    %18 = vector.shape_cast %10 : vector<8x128xf32> to vector<1x1x8x128xf32>
    tpu.vector_store %arg4[%c0_8, %c0_9, %c0_10, %c0_11], %18 {strides = array<i32>} : memref<1x1x96x128xf32, #tpu.memory_space<vmem>>, vector<1x1x8x128xf32>,
    %c0_12 = arith.constant 0 : index
    %c0_13 = arith.constant 0 : index
    %c32 = arith.constant 32 : index
    %c0_14 = arith.constant 0 : index
    %19 = vector.load %arg4[%c0_12, %c0_13, %c32, %c0_14] : memref<1x1x96x128xf32, #tpu.memory_space<vmem>>, vector<1x1x8x128xf32>
    %20 = vector.shape_cast %19 : vector<1x1x8x128xf32> to vector<8x128xf32>
    %21 = vector.shape_cast %12 : vector<8x128xf32> to vector<1x1x8x128xf32>
    tpu.vector_store %arg4[%c0_12, %c0_13, %c32, %c0_14], %21 {strides = array<i32>} : memref<1x1x96x128xf32, #tpu.memory_space<vmem>>, vector<1x1x8x128xf32>,
    %c0_15 = arith.constant 0 : index
    %c0_16 = arith.constant 0 : index
    %c64 = arith.constant 64 : index
    %c0_17 = arith.constant 0 : index
    %22 = vector.load %arg4[%c0_15, %c0_16, %c64, %c0_17] : memref<1x1x96x128xf32, #tpu.memory_space<vmem>>, vector<1x1x8x128xf32>
    %23 = vector.shape_cast %22 : vector<1x1x8x128xf32> to vector<8x128xf32>
    %24 = vector.shape_cast %15 : vector<8x128xf32> to vector<1x1x8x128xf32>
    tpu.vector_store %arg4[%c0_15, %c0_16, %c64, %c0_17], %24 {strides = array<i32>} : memref<1x1x96x128xf32, #tpu.memory_space<vmem>>, vector<1x1x8x128xf32>,
    %c0_18 = arith.constant 0 : index
    %c1 = arith.constant 1 : index
    %c0_19 = arith.constant 0 : index
    %c0_20 = arith.constant 0 : index
    %25 = vector.load %arg2[%c0_18, %c1, %c0_19, %c0_20] : memref<1x4x8x128xf32, #tpu.memory_space<vmem>>, vector<1x1x8x128xf32>
    %26 = vector.shape_cast %25 : vector<1x1x8x128xf32> to vector<8x128xf32>
    %c1_i32 = arith.constant 1 : i32
    %27 = vector.broadcast %c1_i32 : i32 to vector<8x128xi32>
    %28 = arith.cmpi eq, %1, %27 : vector<8x128xi32>
    %29 = arith.extui %28 : vector<8x128xi1> to vector<8x128xi32>
    %30 = arith.sitofp %29 : vector<8x128xi32> to vector<8x128xf32>
    %31 = arith.mulf %26, %30 : vector<8x128xf32>
    %32 = vector.shape_cast %31 : vector<8x128xf32> to vector<1x8x128xf32>
    %cst_21 = arith.constant dense<0.000000e+00> : vector<8x128xf32>
    %33 = vector.multi_reduction <add>, %32, %cst_21 [0] : vector<1x8x128xf32> to vector<8x128xf32>
    %34 = vector.shape_cast %30 : vector<8x128xf32> to vector<1x8x128xf32>
    %cst_22 = arith.constant dense<0.000000e+00> : vector<8x128xf32>
    %35 = vector.multi_reduction <add>, %34, %cst_22 [0] : vector<1x8x128xf32> to vector<8x128xf32>
    %36 = arith.mulf %26, %26 : vector<8x128xf32>
    %37 = vector.shape_cast %36 : vector<8x128xf32> to vector<1x8x128xf32>
    %cst_23 = arith.constant dense<0.000000e+00> : vector<8x128xf32>
    %38 = vector.multi_reduction <add>, %37, %cst_23 [0] : vector<1x8x128xf32> to vector<8x128xf32>
    %c0_24 = arith.constant 0 : index
    %c0_25 = arith.constant 0 : index
    %c8 = arith.constant 8 : index
    %c0_26 = arith.constant 0 : index
    %39 = vector.load %arg4[%c0_24, %c0_25, %c8, %c0_26] : memref<1x1x96x128xf32, #tpu.memory_space<vmem>>, vector<1x1x8x128xf32>
    %40 = vector.shape_cast %39 : vector<1x1x8x128xf32> to vector<8x128xf32>
    %41 = vector.shape_cast %33 : vector<8x128xf32> to vector<1x1x8x128xf32>
    tpu.vector_store %arg4[%c0_24, %c0_25, %c8, %c0_26], %41 {strides = array<i32>} : memref<1x1x96x128xf32, #tpu.memory_space<vmem>>, vector<1x1x8x128xf32>,
    %c0_27 = arith.constant 0 : index
    %c0_28 = arith.constant 0 : index
    %c40 = arith.constant 40 : index
    %c0_29 = arith.constant 0 : index
    %42 = vector.load %arg4[%c0_27, %c0_28, %c40, %c0_29] : memref<1x1x96x128xf32, #tpu.memory_space<vmem>>, vector<1x1x8x128xf32>
    %43 = vector.shape_cast %42 : vector<1x1x8x128xf32> to vector<8x128xf32>
    %44 = vector.shape_cast %35 : vector<8x128xf32> to vector<1x1x8x128xf32>
    tpu.vector_store %arg4[%c0_27, %c0_28, %c40, %c0_29], %44 {strides = array<i32>} : memref<1x1x96x128xf32, #tpu.memory_space<vmem>>, vector<1x1x8x128xf32>,
    %c0_30 = arith.constant 0 : index
    %c0_31 = arith.constant 0 : index
    %c72 = arith.constant 72 : index
    %c0_32 = arith.constant 0 : index
    %45 = vector.load %arg4[%c0_30, %c0_31, %c72, %c0_32] : memref<1x1x96x128xf32, #tpu.memory_space<vmem>>, vector<1x1x8x128xf32>
    %46 = vector.shape_cast %45 : vector<1x1x8x128xf32> to vector<8x128xf32>
    %47 = vector.shape_cast %38 : vector<8x128xf32> to vector<1x1x8x128xf32>
    tpu.vector_store %arg4[%c0_30, %c0_31, %c72, %c0_32], %47 {strides = array<i32>} : memref<1x1x96x128xf32, #tpu.memory_space<vmem>>, vector<1x1x8x128xf32>,
    %c0_33 = arith.constant 0 : index
    %c2 = arith.constant 2 : index
    %c0_34 = arith.constant 0 : index
    %c0_35 = arith.constant 0 : index
    %48 = vector.load %arg2[%c0_33, %c2, %c0_34, %c0_35] : memref<1x4x8x128xf32, #tpu.memory_space<vmem>>, vector<1x1x8x128xf32>
    %49 = vector.shape_cast %48 : vector<1x1x8x128xf32> to vector<8x128xf32>
    %c2_i32 = arith.constant 2 : i32
    %50 = vector.broadcast %c2_i32 : i32 to vector<8x128xi32>
    %51 = arith.cmpi eq, %1, %50 : vector<8x128xi32>
    %52 = arith.extui %51 : vector<8x128xi1> to vector<8x128xi32>
    %53 = arith.sitofp %52 : vector<8x128xi32> to vector<8x128xf32>
    %54 = arith.mulf %49, %53 : vector<8x128xf32>
    %55 = vector.shape_cast %54 : vector<8x128xf32> to vector<1x8x128xf32>
    %cst_36 = arith.constant dense<0.000000e+00> : vector<8x128xf32>
    %56 = vector.multi_reduction <add>, %55, %cst_36 [0] : vector<1x8x128xf32> to vector<8x128xf32>
    %57 = vector.shape_cast %53 : vector<8x128xf32> to vector<1x8x128xf32>
    %cst_37 = arith.constant dense<0.000000e+00> : vector<8x128xf32>
    %58 = vector.multi_reduction <add>, %57, %cst_37 [0] : vector<1x8x128xf32> to vector<8x128xf32>
    %59 = arith.mulf %49, %49 : vector<8x128xf32>
    %60 = vector.shape_cast %59 : vector<8x128xf32> to vector<1x8x128xf32>
    %cst_38 = arith.constant dense<0.000000e+00> : vector<8x128xf32>
    %61 = vector.multi_reduction <add>, %60, %cst_38 [0] : vector<1x8x128xf32> to vector<8x128xf32>
    %c0_39 = arith.constant 0 : index
    %c0_40 = arith.constant 0 : index
    %c16 = arith.constant 16 : index
    %c0_41 = arith.constant 0 : index
    %62 = vector.load %arg4[%c0_39, %c0_40, %c16, %c0_41] : memref<1x1x96x128xf32, #tpu.memory_space<vmem>>, vector<1x1x8x128xf32>
    %63 = vector.shape_cast %62 : vector<1x1x8x128xf32> to vector<8x128xf32>
    %64 = vector.shape_cast %56 : vector<8x128xf32> to vector<1x1x8x128xf32>
    tpu.vector_store %arg4[%c0_39, %c0_40, %c16, %c0_41], %64 {strides = array<i32>} : memref<1x1x96x128xf32, #tpu.memory_space<vmem>>, vector<1x1x8x128xf32>,
    %c0_42 = arith.constant 0 : index
    %c0_43 = arith.constant 0 : index
    %c48 = arith.constant 48 : index
    %c0_44 = arith.constant 0 : index
    %65 = vector.load %arg4[%c0_42, %c0_43, %c48, %c0_44] : memref<1x1x96x128xf32, #tpu.memory_space<vmem>>, vector<1x1x8x128xf32>
    %66 = vector.shape_cast %65 : vector<1x1x8x128xf32> to vector<8x128xf32>
    %67 = vector.shape_cast %58 : vector<8x128xf32> to vector<1x1x8x128xf32>
    tpu.vector_store %arg4[%c0_42, %c0_43, %c48, %c0_44], %67 {strides = array<i32>} : memref<1x1x96x128xf32, #tpu.memory_space<vmem>>, vector<1x1x8x128xf32>,
    %c0_45 = arith.constant 0 : index
    %c0_46 = arith.constant 0 : index
    %c80 = arith.constant 80 : index
    %c0_47 = arith.constant 0 : index
    %68 = vector.load %arg4[%c0_45, %c0_46, %c80, %c0_47] : memref<1x1x96x128xf32, #tpu.memory_space<vmem>>, vector<1x1x8x128xf32>
    %69 = vector.shape_cast %68 : vector<1x1x8x128xf32> to vector<8x128xf32>
    %70 = vector.shape_cast %61 : vector<8x128xf32> to vector<1x1x8x128xf32>
    tpu.vector_store %arg4[%c0_45, %c0_46, %c80, %c0_47], %70 {strides = array<i32>} : memref<1x1x96x128xf32, #tpu.memory_space<vmem>>, vector<1x1x8x128xf32>,
    %c0_48 = arith.constant 0 : index
    %c3 = arith.constant 3 : index
    %c0_49 = arith.constant 0 : index
    %c0_50 = arith.constant 0 : index
    %71 = vector.load %arg2[%c0_48, %c3, %c0_49, %c0_50] : memref<1x4x8x128xf32, #tpu.memory_space<vmem>>, vector<1x1x8x128xf32>
    %72 = vector.shape_cast %71 : vector<1x1x8x128xf32> to vector<8x128xf32>
    %c3_i32 = arith.constant 3 : i32
    %73 = vector.broadcast %c3_i32 : i32 to vector<8x128xi32>
    %74 = arith.cmpi eq, %1, %73 : vector<8x128xi32>
    %75 = arith.extui %74 : vector<8x128xi1> to vector<8x128xi32>
    %76 = arith.sitofp %75 : vector<8x128xi32> to vector<8x128xf32>
    %77 = arith.mulf %72, %76 : vector<8x128xf32>
    %78 = vector.shape_cast %77 : vector<8x128xf32> to vector<1x8x128xf32>
    %cst_51 = arith.constant dense<0.000000e+00> : vector<8x128xf32>
    %79 = vector.multi_reduction <add>, %78, %cst_51 [0] : vector<1x8x128xf32> to vector<8x128xf32>
    %80 = vector.shape_cast %76 : vector<8x128xf32> to vector<1x8x128xf32>
    %cst_52 = arith.constant dense<0.000000e+00> : vector<8x128xf32>
    %81 = vector.multi_reduction <add>, %80, %cst_52 [0] : vector<1x8x128xf32> to vector<8x128xf32>
    %82 = arith.mulf %72, %72 : vector<8x128xf32>
    %83 = vector.shape_cast %82 : vector<8x128xf32> to vector<1x8x128xf32>
    %cst_53 = arith.constant dense<0.000000e+00> : vector<8x128xf32>
    %84 = vector.multi_reduction <add>, %83, %cst_53 [0] : vector<1x8x128xf32> to vector<8x128xf32>
    %c0_54 = arith.constant 0 : index
    %c0_55 = arith.constant 0 : index
    %c24 = arith.constant 24 : index
    %c0_56 = arith.constant 0 : index
    %85 = vector.load %arg4[%c0_54, %c0_55, %c24, %c0_56] : memref<1x1x96x128xf32, #tpu.memory_space<vmem>>, vector<1x1x8x128xf32>
    %86 = vector.shape_cast %85 : vector<1x1x8x128xf32> to vector<8x128xf32>
    %87 = vector.shape_cast %79 : vector<8x128xf32> to vector<1x1x8x128xf32>
    tpu.vector_store %arg4[%c0_54, %c0_55, %c24, %c0_56], %87 {strides = array<i32>} : memref<1x1x96x128xf32, #tpu.memory_space<vmem>>, vector<1x1x8x128xf32>,
    %c0_57 = arith.constant 0 : index
    %c0_58 = arith.constant 0 : index
    %c56 = arith.constant 56 : index
    %c0_59 = arith.constant 0 : index
    %88 = vector.load %arg4[%c0_57, %c0_58, %c56, %c0_59] : memref<1x1x96x128xf32, #tpu.memory_space<vmem>>, vector<1x1x8x128xf32>
    %89 = vector.shape_cast %88 : vector<1x1x8x128xf32> to vector<8x128xf32>
    %90 = vector.shape_cast %81 : vector<8x128xf32> to vector<1x1x8x128xf32>
    tpu.vector_store %arg4[%c0_57, %c0_58, %c56, %c0_59], %90 {strides = array<i32>} : memref<1x1x96x128xf32, #tpu.memory_space<vmem>>, vector<1x1x8x128xf32>,
    %c0_60 = arith.constant 0 : index
    %c0_61 = arith.constant 0 : index
    %c88 = arith.constant 88 : index
    %c0_62 = arith.constant 0 : index
    %91 = vector.load %arg4[%c0_60, %c0_61, %c88, %c0_62] : memref<1x1x96x128xf32, #tpu.memory_space<vmem>>, vector<1x1x8x128xf32>
    %92 = vector.shape_cast %91 : vector<1x1x8x128xf32> to vector<8x128xf32>
    %93 = vector.shape_cast %84 : vector<8x128xf32> to vector<1x1x8x128xf32>
    tpu.vector_store %arg4[%c0_60, %c0_61, %c88, %c0_62], %93 {strides = array<i32>} : memref<1x1x96x128xf32, #tpu.memory_space<vmem>>, vector<1x1x8x128xf32>,
    return
  }
  func.func @transform_0(%arg0: i32, %arg1: i32) -> (i32, i32, i32, i32) {
    %c0_i32 = arith.constant 0 : i32
    %c0_i32_0 = arith.constant 0 : i32
    %c0_i32_1 = arith.constant 0 : i32
    return %arg0, %c0_i32, %arg1, %c0_i32_0 : i32, i32, i32, i32
  }
  func.func @transform_1(%arg0: i32, %arg1: i32) -> (i32, i32, i32) {
    %c0_i32 = arith.constant 0 : i32
    %c0_i32_0 = arith.constant 0 : i32
    return %arg0, %arg1, %c0_i32 : i32, i32, i32
  }
  func.func @transform_2(%arg0: i32, %arg1: i32) -> (i32, i32, i32, i32) {
    %c0_i32 = arith.constant 0 : i32
    %c0_i32_0 = arith.constant 0 : i32
    %c0_i32_1 = arith.constant 0 : i32
    return %arg0, %arg1, %c0_i32, %c0_i32_0 : i32, i32, i32, i32
  }
}

</mosaic_0001>

<llo_original>
// kernel: squeeze.4
$region0: #{squeeze.4}
  %s0 = inlined_call_operand.hbm [shape: s32[2,1,16,16], index: 0, kind: input, shape index: {}]
  %s1 = inlined_call_operand.vmem [shape: s32[2,256], index: 1, kind: output, shape index: {}]
  $region1: #{squeeze.4} parent=0
    #allocation0 [shape = 'u8[16384]{0}', space=vmem, size = 0x4000, scoped, tag = 'operand span for operand 0']
    #allocation1 [shape = 's32[1]{0}', space=sflag, size = 0x4, scoped, tag = 'scoped memory for squeeze.4']
    #allocation2 [shape = 'u8[8192]{0}', space=vmem, size = 0x2000, scoped, tag = 'scoped mem for output reshape']
    %2 = vsyncpa [#allocation1], 0
    %s4 = ssub.s32 512, 512
    %5 = vsyncadd [#allocation1], %s4
    %s7 = sshll.u32 [#allocation0], 4
    %s8 = int_to_ptr.vmem [resolvable:$true] %s7
    %10 = dma.hbm_to_vmem [thread:$0]  %s0, 512, %s8, [#allocation1]
    %11 = dma.done [#allocation1], 512
    %v12 = vld [vmem:[#allocation0] ss:$8 sm:$0xf]
    %vm13 = vcmask 130048
    %14 = vst.msk [vmem:[#allocation2] ss:$8 sm:$0x3] %vm13, %v12
    %s15 = scalar_lea.vmem [#allocation2], 4294967281
    %16 = vst.msk [vmem:[%s15] ss:$8 sm:$0xc] %vm13, %v12
    %s17 = scalar_lea.vmem [#allocation0], 7
    %s18 = smov 3
    %v19 = vld [vmem:[%s17] ss:$16 sm:%s18]
    %s20 = scalar_lea.vmem [#allocation0], 4294967279
    %s21 = smov 12
    %v22 = vld [vmem:[%s20] ss:$16 sm:%s21]
    %vm23 = vcmask 1043458
    %v24 = vsel %vm23, %v22, %v19
    %25 = vrot.lane.b32.xlu0 %v24, 112
    %v26 = vpop.permute.xlu0 %25
    %vm27 = vcmask 1048448
    %28 = vst.msk [vmem:[#allocation2] sm:$0x3] %vm27, %v26
    %s29 = scalar_lea.vmem [#allocation2], 6
    %30 = vst.msk [vmem:[%s29] sm:$0xc] %vm27, %v26
    %s31 = scalar_lea.vmem [#allocation0], 6
    %s32 = smov 3
    %v33 = vld [vmem:[%s31] ss:$16 sm:%s32]
    %s34 = scalar_lea.vmem [#allocation0], 4294967278
    %s35 = smov 12
    %v36 = vld [vmem:[%s34] ss:$16 sm:%s35]
    %vm37 = vcmask 1043458
    %v38 = vsel %vm37, %v36, %v33
    %39 = vrot.lane.b32.xlu0 %v38, 96
    %v40 = vpop.permute.xlu0 %39
    %vm41 = vcmask 917248
    %42 = vst.msk [vmem:[#allocation2] sm:$0x3] %vm41, %v40
    %s43 = scalar_lea.vmem [#allocation2], 6
    %44 = vst.msk [vmem:[%s43] sm:$0xc] %vm41, %v40
    %s45 = scalar_lea.vmem [#allocation0], 5
    %s46 = smov 3
    %v47 = vld [vmem:[%s45] ss:$16 sm:%s46]
    %s48 = scalar_lea.vmem [#allocation0], 4294967277
    %s49 = smov 12
    %v50 = vld [vmem:[%s48] ss:$16 sm:%s49]
    %vm51 = vcmask 1043458
    %v52 = vsel %vm51, %v50, %v47
    %53 = vrot.lane.b32.xlu0 %v52, 80
    %v54 = vpop.permute.xlu0 %53
    %vm55 = vcmask 786048
    %56 = vst.msk [vmem:[#allocation2] sm:$0x3] %vm55, %v54
    %s57 = scalar_lea.vmem [#allocation2], 6
    %58 = vst.msk [vmem:[%s57] sm:$0xc] %vm55, %v54
    %s59 = scalar_lea.vmem [#allocation0], 4
    %s60 = smov 3
    %v61 = vld [vmem:[%s59] ss:$16 sm:%s60]
    %s62 = scalar_lea.vmem [#allocation0], 4294967276
    %s63 = smov 12
    %v64 = vld [vmem:[%s62] ss:$16 sm:%s63]
    %vm65 = vcmask 1043458
    %v66 = vsel %vm65, %v64, %v61
    %67 = vrot.lane.b32.xlu0 %v66, 64
    %v68 = vpop.permute.xlu0 %67
    %vm69 = vcmask 654848
    %70 = vst.msk [vmem:[#allocation2] sm:$0x3] %vm69, %v68
    %s71 = scalar_lea.vmem [#allocation2], 6
    %72 = vst.msk [vmem:[%s71] sm:$0xc] %vm69, %v68
    %s73 = scalar_lea.vmem [#allocation0], 3
    %s74 = smov 3
    %v75 = vld [vmem:[%s73] ss:$16 sm:%s74]
    %s76 = scalar_lea.vmem [#allocation0], 4294967275
    %s77 = smov 12
    %v78 = vld [vmem:[%s76] ss:$16 sm:%s77]
    %vm79 = vcmask 1043458
    %v80 = vsel %vm79, %v78, %v75
    %81 = vrot.lane.b32.xlu0 %v80, 48
    %v82 = vpop.permute.xlu0 %81
    %vm83 = vcmask 523648
    %84 = vst.msk [vmem:[#allocation2] sm:$0x3] %vm83, %v82
    %s85 = scalar_lea.vmem [#allocation2], 6
    %86 = vst.msk [vmem:[%s85] sm:$0xc] %vm83, %v82
    %s87 = scalar_lea.vmem [#allocation0], 2
    %s88 = smov 3
    %v89 = vld [vmem:[%s87] ss:$16 sm:%s88]
    %s90 = scalar_lea.vmem [#allocation0], 4294967274
    %s91 = smov 12
    %v92 = vld [vmem:[%s90] ss:$16 sm:%s91]
    %vm93 = vcmask 1043458
    %v94 = vsel %vm93, %v92, %v89
    %95 = vrot.lane.b32.xlu0 %v94, 32
    %v96 = vpop.permute.xlu0 %95
    %vm97 = vcmask 392448
    %98 = vst.msk [vmem:[#allocation2] sm:$0x3] %vm97, %v96
    %s99 = scalar_lea.vmem [#allocation2], 6
    %100 = vst.msk [vmem:[%s99] sm:$0xc] %vm97, %v96
    %s101 = scalar_lea.vmem [#allocation0], 1
    %s102 = smov 3
    %v103 = vld [vmem:[%s101] ss:$16 sm:%s102]
    %s104 = scalar_lea.vmem [#allocation0], 4294967273
    %s105 = smov 12
    %v106 = vld [vmem:[%s104] ss:$16 sm:%s105]
    %vm107 = vcmask 1043458
    %v108 = vsel %vm107, %v106, %v103
    %109 = vrot.lane.b32.xlu0 %v108, 16
    %v110 = vpop.permute.xlu0 %109
    %vm111 = vcmask 261248
    %112 = vst.msk [vmem:[#allocation2] sm:$0x3] %vm111, %v110
    %s113 = scalar_lea.vmem [#allocation2], 6
    %114 = vst.msk [vmem:[%s113] sm:$0xc] %vm111, %v110
    %s116 = sshllo.u32 0, 2
    %v118 = vld [vmem:[#allocation2] sm:%s116]
    %s119 = sshllo.u32 0, 2
    %120 = vst [vmem:[%s1] sm:%s119] %v118
    %s121 = scalar_lea.vmem [#allocation2], 8
    %v122 = vld [vmem:[%s121] sm:%s116]
    %s123 = sshllo.u32 0, 2
    %s124 = scalar_lea.vmem %s1, 2
    %125 = vst [vmem:[%s124] sm:%s123] %v122
    %126 = vsyncpa [#allocation1], 1

// kernel: dice_loss.1
$region0: #{dice_loss.1}
  #allocation0 [shape = 'u32[]', space=smem, size = 0x4, offset = 0x4, fixed_abs, tag = 'smem constant byte address 0x4 - core index']
  #allocation1 [shape = 'u32[144,128]{1,0:T(1,128)}', space=vmem, size = 0x12000, scoped, tag = 'internal scratch']
  %s0 = inlined_call_operand.vmem [shape: f32[2,4,8,128], index: 0, kind: input, shape index: {}]
  %s1 = inlined_call_operand.vmem [shape: s32[2,8,128], index: 1, kind: input, shape index: {}]
  %s2 = inlined_call_operand.vmem [shape: f32[2,1,96,128], index: 2, kind: output, shape index: {}]
  %s3 = sld [smem:[#allocation0]]
  $region41: #{dice_loss.1} parent=0
    _
  %s5 = ssub.s32 1, %s3
  %s6 = scalar_select 0, %s5, %s3
  loop: start=0, step=1, limit=4
  $region2: #{dice_loss.1} parent=0 // loop_pre_header
    _
  $region3: #{dice_loss.1} parent=0 // loop_header
    %s8 = sphi 0, %s12
    %p9 = scmp.ge.s32.totalorder %s8, 4
    %s15 = sphi 0, %s27
    %s16 = sphi 0, %s23
    %s17 = sphi 0, %s15
    %s18 = sphi 0, %s16
    %s19 = sphi 0, %s17
    %s20 = sphi 0, %s18
    %s32 = sphi 0, %s34
    %s35 = sphi 0, %s32
    %s36 = sphi 0, %s35
    %s52 = sphi 0, %s36
    %s60 = sphi 0, %s62
    %s63 = sphi 0, %s60
    %s64 = sphi 0, %s63
    %s80 = sphi 0, %s64
    %s88 = sphi 0, %s90
    %s91 = sphi 0, %s88
    %s92 = sphi 0, %s91
    %s108 = sphi 0, %s92
  $region4: #{dice_loss.1} parent=0 // loop_header_branch
    %11 = sbr.rel (%p9) target = $region8
  $region5: #{dice_loss.1} parent=0 // loop_body
    %s13 = ssub.s32 %s8, 1
    %s14 = ssub.s32 %s8, 2
    %s21 = sadd.s32 1, %s16
    %p22 = scmp.ge.s32.totalorder %s21, 1
    %s23 = scalar_select %p22, 0, %s21
    %s24 = sadd.s32 1, %s15
    %s25 = scalar_select %p22, %s24, %s15
    %p26 = scmp.ge.s32.totalorder %s25, 2
    %s27 = scalar_select %p26, 0, %s25
    %s28 = ssub.s32 %s15, %s27
    %s29 = ssub.s32 %s16, %s23
    %s30 = sor.u32 %s28, %s29
    %p31 = scmp.eq.s32.totalorder %s30, 0
    %s33 = sadd.s32 %s32, 1
    %s34 = scalar_select %p31, %s32, %s33
    %p37 = pneg %p31
    %p38 = scmp.eq.s32.totalorder %s8, 1
    %p39 = por %p37, %p38
    %p40 = scmp.ne.s32.totalorder %s32, %s35
    %p41 = scmp.eq.s32.totalorder %s8, 0
    %p42 = por %p40, %p41
    %p43 = scmp.ne.s32.totalorder %s32, %s35
    %p44 = scmp.eq.s32.totalorder %s13, 1
    %p45 = por %p43, %p44
    %p46 = scmp.ne.s32.totalorder %s35, %s36
    %p47 = scmp.eq.s32.totalorder %s13, 0
    %p48 = por %p46, %p47
    %p49 = scmp.ne.s32.totalorder %s35, %s36
    %p50 = scmp.eq.s32.totalorder %s14, 1
    %p51 = por %p49, %p50
    %p53 = scmp.ne.s32.totalorder %s36, %s52
    %p54 = scmp.eq.s32.totalorder %s14, 0
    %p55 = por %p53, %p54
    %s56 = ssub.s32 %s15, %s27
    %s57 = ssub.s32 %s16, %s23
    %s58 = sor.u32 %s56, %s57
    %p59 = scmp.eq.s32.totalorder %s58, 0
    %s61 = sadd.s32 %s60, 1
    %s62 = scalar_select %p59, %s60, %s61
    %p65 = pneg %p59
    %p66 = scmp.eq.s32.totalorder %s8, 1
    %p67 = por %p65, %p66
    %p68 = scmp.ne.s32.totalorder %s60, %s63
    %p69 = scmp.eq.s32.totalorder %s8, 0
    %p70 = por %p68, %p69
    %p71 = scmp.ne.s32.totalorder %s60, %s63
    %p72 = scmp.eq.s32.totalorder %s13, 1
    %p73 = por %p71, %p72
    %p74 = scmp.ne.s32.totalorder %s63, %s64
    %p75 = scmp.eq.s32.totalorder %s13, 0
    %p76 = por %p74, %p75
    %p77 = scmp.ne.s32.totalorder %s63, %s64
    %p78 = scmp.eq.s32.totalorder %s14, 1
    %p79 = por %p77, %p78
    %p81 = scmp.ne.s32.totalorder %s64, %s80
    %p82 = scmp.eq.s32.totalorder %s14, 0
    %p83 = por %p81, %p82
    %s84 = ssub.s32 %s15, %s27
    %s85 = ssub.s32 %s16, %s23
    %s86 = sor.u32 %s84, %s85
    %p87 = scmp.eq.s32.totalorder %s86, 0
    %s89 = sadd.s32 %s88, 1
    %s90 = scalar_select %p87, %s88, %s89
    %p93 = pneg %p87
    %p94 = scmp.eq.s32.totalorder %s8, 1
    %p95 = por %p93, %p94
    %p96 = scmp.ne.s32.totalorder %s88, %s91
    %p97 = scmp.eq.s32.totalorder %s8, 0
    %p98 = por %p96, %p97
    %p99 = scmp.ne.s32.totalorder %s88, %s91
    %p100 = scmp.eq.s32.totalorder %s13, 1
    %p101 = por %p99, %p100
    %p102 = scmp.ne.s32.totalorder %s91, %s92
    %p103 = scmp.eq.s32.totalorder %s13, 0
    %p104 = por %p102, %p103
    %p105 = scmp.ne.s32.totalorder %s91, %s92
    %p106 = scmp.eq.s32.totalorder %s14, 1
    %p107 = por %p105, %p106
    %p109 = scmp.ne.s32.totalorder %s92, %s108
    %p110 = scmp.eq.s32.totalorder %s14, 0
    %p111 = por %p109, %p110
    %p112 = scmp.le.s32.totalorder 1, %s8
    %p113 = scmp.lt.s32.totalorder %s8, 3
    %p114 = pnand %p112, %p113
    %p115 = pneg %p114
    // Predicated region
    $region9: #{dice_loss.1} parent=5 // pred_check
      _
    $region10: #{dice_loss.1} parent=5 // pred_check_branch
      %117 = sbr.rel (%p114) target = $region12
    $region11: #{dice_loss.1} parent=5 // pred_region
      %s118 = ssub.s32 %s8, 1
    $region12: #{dice_loss.1} parent=5 // pred_fallthru
      _
    %p119 = scmp.lt.s32.totalorder %s8, 2
    // Predicated region
    $region13: #{dice_loss.1} parent=5 // pred_check
      %p120 = pneg %p119
    $region14: #{dice_loss.1} parent=5 // pred_check_branch
      %122 = sbr.rel (%p120) target = $region16
    $region15: #{dice_loss.1} parent=5 // pred_region
      // Predicated region
      $region17: #{dice_loss.1} parent=15 // pred_check
        %p123 = pneg %p42
      $region18: #{dice_loss.1} parent=15 // pred_check_branch
        %125 = sbr.rel (%p123) target = $region20
      $region19: #{dice_loss.1} parent=15 // pred_region
        %p126 = scmp.lt.s32.totalorder %s15, 1
        %s127 = scalar_select %p126, %s15, 1
        %p128 = scmp.lt.s32.totalorder %s16, 0
        %s129 = scalar_select %p128, %s16, 0
        %s130 = smul.addr %s127, 4
        %s131 = sadd.s32 %s129, %s130
        %s132 = smul.addr %s131, 8
        %s133 = scalar_lea.vmem %s0, %s132
      $region20: #{dice_loss.1} parent=15 // pred_fallthru
        _
      // Predicated region
      $region21: #{dice_loss.1} parent=15 // pred_check
        %p134 = pneg %p70
      $region22: #{dice_loss.1} parent=15 // pred_check_branch
        %136 = sbr.rel (%p134) target = $region24
      $region23: #{dice_loss.1} parent=15 // pred_region
        %p137 = scmp.lt.s32.totalorder %s15, 1
        %s138 = scalar_select %p137, %s15, 1
        %p139 = scmp.lt.s32.totalorder %s16, 0
        %s140 = scalar_select %p139, %s16, 0
        %s141 = sadd.s32 %s140, %s138
        %s142 = smul.addr %s141, 8
        %s143 = scalar_lea.vmem %s1, %s142
      $region24: #{dice_loss.1} parent=15 // pred_fallthru
        _
    $region16: #{dice_loss.1} parent=5 // pred_fallthru
      _
    %p144 = scmp.le.s32.totalorder 1, %s8
    %p145 = scmp.lt.s32.totalorder %s8, 3
    %p146 = pnand %p144, %p145
    %p147 = pneg %p146
    // Predicated region
    $region25: #{dice_loss.1} parent=5 // pred_check
      _
    $region26: #{dice_loss.1} parent=5 // pred_check_branch
      %149 = sbr.rel (%p146) target = $region28
    $region27: #{dice_loss.1} parent=5 // pred_region
      %s150 = ssub.s32 %s8, 1
      %p151 = scmp.lt.s32.totalorder %s17, 1
      %s152 = scalar_select %p151, %s17, 1
      %p153 = scmp.lt.s32.totalorder %s18, 0
      %s154 = scalar_select %p153, %s18, 0
      %s155 = smul.addr %s152, 4
      %s156 = sadd.s32 %s154, %s155
      %s157 = smul.addr %s156, 8
      %s158 = scalar_lea.vmem %s0, %s157
      %p159 = pneg %p48
      %p160 = pneg %p45
      %p161 = scmp.lt.s32.totalorder %s17, 1
      %s162 = scalar_select %p161, %s17, 1
      %p163 = scmp.lt.s32.totalorder %s18, 0
      %s164 = scalar_select %p163, %s18, 0
      %s165 = sadd.s32 %s164, %s162
      %s166 = smul.addr %s165, 8
      %s167 = scalar_lea.vmem %s1, %s166
      %p168 = pneg %p76
      %p169 = pneg %p73
      %p170 = pneg %p104
      %p171 = pneg %p101
      %p172 = scmp.lt.s32.totalorder %s17, 1
      %s173 = scalar_select %p172, %s17, 1
      %p174 = scmp.lt.s32.totalorder %s18, 0
      %s175 = scalar_select %p174, %s18, 0
      %s176 = smul.addr %s175, 12
      %s177 = smul.addr %s173, 12
      %s178 = sadd.s32 %s176, %s177
      %s179 = smul.addr %s178, 8
      %s180 = scalar_lea.vmem %s2, %s179
      %p181 = scmp.lt.s32.totalorder %s17, 1
      %s182 = scalar_select %p181, %s17, 1
      %p183 = scmp.lt.s32.totalorder %s18, 0
      %s184 = scalar_select %p183, %s18, 0
      %s185 = smul.addr %s182, 4
      %s186 = sadd.s32 %s184, %s185
      %s187 = smul.addr %s186, 8
      %s188 = scalar_lea.vmem %s0, %s187
      %p189 = scmp.lt.s32.totalorder %s17, 1
      %s190 = scalar_select %p189, %s17, 1
      %p191 = scmp.lt.s32.totalorder %s18, 0
      %s192 = scalar_select %p191, %s18, 0
      %s193 = sadd.s32 %s192, %s190
      %s194 = smul.addr %s193, 8
      %s195 = scalar_lea.vmem %s1, %s194
      %p196 = scmp.lt.s32.totalorder %s17, 1
      %s197 = scalar_select %p196, %s17, 1
      %p198 = scmp.lt.s32.totalorder %s18, 0
      %s199 = scalar_select %p198, %s18, 0
      %s200 = smul.addr %s199, 12
      %s201 = smul.addr %s197, 12
      %s202 = sadd.s32 %s200, %s201
      %s203 = smul.addr %s202, 8
      %s204 = scalar_lea.vmem %s2, %s203
      %v205 = vld [vmem:[%s195] sm:$0xff]
      %v206 = vld [vmem:[%s188] sm:$0xff]
      %vm207 = vcmp.eq.s32.totalorder %v205, 0
      %v208 = vsel %vm207, 1, 0
      %v209 = vcvt.s32.f32 %v208
      %v210 = vmul.f32 %v206, %v209
      %v211 = vadd.f32 %v210, 0.0
      %v212 = vadd.f32 %v209, 0.0
      %v213 = vmul.f32 %v206, %v206
      %v214 = vadd.f32 %v213, 0.0
      %215 = vst [vmem:[%s204] sm:$0xff] %v211
      %216 = vst [vmem:[%s204 + $0x20] sm:$0xff] %v212
      %217 = vst [vmem:[%s204 + $0x40] sm:$0xff] %v214
      %s218 = scalar_lea.vmem %s188, 8
      %v219 = vld [vmem:[%s218] sm:$0xff]
      %vm220 = vcmp.eq.s32.totalorder %v205, 1
      %v221 = vsel %vm220, 1, 0
      %v222 = vcvt.s32.f32 %v221
      %v223 = vmul.f32 %v219, %v222
      %v224 = vadd.f32 %v223, 0.0
      %v225 = vadd.f32 %v222, 0.0
      %v226 = vmul.f32 %v219, %v219
      %v227 = vadd.f32 %v226, 0.0
      %228 = vst [vmem:[%s204 + $0x8] sm:$0xff] %v224
      %229 = vst [vmem:[%s204 + $0x28] sm:$0xff] %v225
      %230 = vst [vmem:[%s204 + $0x48] sm:$0xff] %v227
      %s231 = scalar_lea.vmem %s188, 16
      %v232 = vld [vmem:[%s231] sm:$0xff]
      %vm233 = vcmp.eq.s32.totalorder %v205, 2
      %v234 = vsel %vm233, 1, 0
      %v235 = vcvt.s32.f32 %v234
      %v236 = vmul.f32 %v232, %v235
      %v237 = vadd.f32 %v236, 0.0
      %v238 = vadd.f32 %v235, 0.0
      %v239 = vmul.f32 %v232, %v232
      %v240 = vadd.f32 %v239, 0.0
      %241 = vst [vmem:[%s204 + $0x10] sm:$0xff] %v237
      %242 = vst [vmem:[%s204 + $0x30] sm:$0xff] %v238
      %243 = vst [vmem:[%s204 + $0x50] sm:$0xff] %v240
      %s244 = scalar_lea.vmem %s188, 24
      %v245 = vld [vmem:[%s244] sm:$0xff]
      %vm246 = vcmp.eq.s32.totalorder %v205, 3
      %v247 = vsel %vm246, 1, 0
      %v248 = vcvt.s32.f32 %v247
      %v249 = vmul.f32 %v245, %v248
      %v250 = vadd.f32 %v249, 0.0
      %v251 = vadd.f32 %v248, 0.0
      %v252 = vmul.f32 %v245, %v245
      %v253 = vadd.f32 %v252, 0.0
      %254 = vst [vmem:[%s204 + $0x18] sm:$0xff] %v250
      %255 = vst [vmem:[%s204 + $0x38] sm:$0xff] %v251
      %256 = vst [vmem:[%s204 + $0x58] sm:$0xff] %v253
      %p257 = scmp.lt.s32.totalorder %s17, 1
      %s258 = scalar_select %p257, %s17, 1
      %p259 = scmp.lt.s32.totalorder %s18, 0
      %s260 = scalar_select %p259, %s18, 0
      %s261 = smul.addr %s260, 12
      %s262 = smul.addr %s258, 12
      %s263 = sadd.s32 %s261, %s262
      %s264 = smul.addr %s263, 8
      %s265 = scalar_lea.vmem %s2, %s264
      // Predicated region
      $region29: #{dice_loss.1} parent=27 // pred_check
        %p266 = pneg %p101
      $region30: #{dice_loss.1} parent=27 // pred_check_branch
        %268 = sbr.rel (%p266) target = $region32
      $region31: #{dice_loss.1} parent=27 // pred_region
        _
      $region32: #{dice_loss.1} parent=27 // pred_fallthru
        _
    $region28: #{dice_loss.1} parent=5 // pred_fallthru
      _
    %p269 = scmp.le.s32.totalorder 2, %s8
    // Predicated region
    $region33: #{dice_loss.1} parent=5 // pred_check
      %p270 = pneg %p269
    $region34: #{dice_loss.1} parent=5 // pred_check_branch
      %272 = sbr.rel (%p270) target = $region36
    $region35: #{dice_loss.1} parent=5 // pred_region
      %s273 = ssub.s32 %s8, 2
      // Predicated region
      $region37: #{dice_loss.1} parent=35 // pred_check
        %p274 = pneg %p107
      $region38: #{dice_loss.1} parent=35 // pred_check_branch
        %276 = sbr.rel (%p274) target = $region40
      $region39: #{dice_loss.1} parent=35 // pred_region
        %p277 = scmp.lt.s32.totalorder %s19, 1
        %s278 = scalar_select %p277, %s19, 1
        %p279 = scmp.lt.s32.totalorder %s20, 0
        %s280 = scalar_select %p279, %s20, 0
        %s281 = smul.addr %s280, 12
        %s282 = smul.addr %s278, 12
        %s283 = sadd.s32 %s281, %s282
        %s284 = smul.addr %s283, 8
        %s285 = scalar_lea.vmem %s2, %s284
      $region40: #{dice_loss.1} parent=35 // pred_fallthru
        _
    $region36: #{dice_loss.1} parent=5 // pred_fallthru
      _
  $region6: #{dice_loss.1} parent=0 // loop_footer
    %s12 = sadd.s32 1, %s8
  $region7: #{dice_loss.1} parent=0 // loop_footer_branch
    %7 = sbr.rel target = $region3
  $region8: #{dice_loss.1} parent=0 // loop_exit
    _

</llo_original>
